<compile_context>
chip_gen: v5e
topology: v5e:2x2
jax: 0.10.0
libtpu: 0.0.40
codegen_flags: <defaults>
</compile_context>

<pallas_src>
import functools
import math

import jax
import jax.numpy as jnp
from jax.experimental import pallas as pl
from jax.experimental.pallas import tpu as pltpu


def _round_up(x, m):
    return ((x + m - 1) // m) * m


def attn_kernel(q_ref, k_ref, v_ref, vl_ref, o_ref, *, scale):
    # q_ref : (1, tq, Dp)   k_ref : (1, Kp, Dp)   v_ref : (1, Kp, Vp)
    # vl_ref: (1, tq, 1) int32 valid length per query row
    # o_ref : (1, tq, Vp)
    q = q_ref[0]                      # (tq, Dp)
    k = k_ref[0]                      # (Kp, Dp)
    v = v_ref[0]                      # (Kp, Vp)
    vl = vl_ref[0]                    # (tq, 1)

    # scores = (q @ k^T) * scale  -- contraction on the feature axis ("nt" matmul).
    scores = jax.lax.dot_general(
        q, k, (((1,), (1,)), ((), ())),
        preferred_element_type=jnp.float32) * scale            # (tq, Kp)

    # masked softmax, matching d2l.masked_softmax (masked positions -> -1e6).
    kpos = jax.lax.broadcasted_iota(jnp.int32, scores.shape, 1)
    scores = jnp.where(kpos < vl, scores, -1e6)
    m = jnp.max(scores, axis=-1, keepdims=True)
    p = jnp.exp(scores - m)                                     # EUP
    w = p * pl.reciprocal(jnp.sum(p, axis=-1, keepdims=True), approx=False)

    # (dropout == identity; see TODO above)
    out = jnp.dot(w.astype(v.dtype), v, preferred_element_type=jnp.float32)
    o_ref[0] = out.astype(o_ref.dtype)


def dot_product_attention(queries, keys, values, valid_lens=None, *, tq=None):
    """queries (B,Q,D), keys (B,K,D), values (B,K,V); valid_lens None | (B,) | (B,Q)."""
    B, Q, D = queries.shape
    Bk, K, Dk = keys.shape
    Bv, Kv, V = values.shape
    assert B == Bk == Bv and D == Dk and K == Kv

    # Lane-dense padding: feature/key/value dims -> multiples of 128,
    # query rows -> multiple of the row tile (sublane-aligned).
    Dp = _round_up(D, 128)
    Kp = _round_up(K, 128)
    Vp = _round_up(V, 128)
    if tq is None:
        tq = min(256, _round_up(Q, 8))      # large row tile, multiple of 8
    Qp = _round_up(Q, tq)

    qp = jnp.pad(queries, ((0, 0), (0, Qp - Q), (0, Dp - D)))
    kp = jnp.pad(keys,    ((0, 0), (0, Kp - K), (0, Dp - D)))
    vp = jnp.pad(values,  ((0, 0), (0, Kp - K), (0, Vp - V)))

    if valid_lens is None:
        vl = jnp.full((B, Q), K, dtype=jnp.int32)
    elif valid_lens.ndim == 1:
        vl = jnp.broadcast_to(valid_lens.astype(jnp.int32)[:, None], (B, Q))
    else:
        vl = valid_lens.astype(jnp.int32)
    # Padded query rows get valid_len=1 (their output is sliced away); padded key
    # columns (index >= K >= valid_len) are masked automatically by the compare.
    vl = jnp.pad(vl, ((0, 0), (0, Qp - Q)), constant_values=1)[:, :, None]  # (B,Qp,1)

    grid = (B, Qp // tq)
    scale = 1.0 / math.sqrt(D)

    itemsize = queries.dtype.itemsize
    cost = pl.CostEstimate(
        flops=2 * B * Qp * Kp * (Dp + Vp),
        transcendentals=B * Qp * Kp,
        bytes_accessed=(qp.size + kp.size + vp.size + B * Qp * Vp) * itemsize,
    )

    out = pl.pallas_call(
        functools.partial(attn_kernel, scale=scale),
        out_shape=jax.ShapeDtypeStruct((B, Qp, Vp), queries.dtype),
        grid_spec=pltpu.PrefetchScalarGridSpec(
            num_scalar_prefetch=0,
            grid=grid,
            in_specs=[
                pl.BlockSpec((1, tq, Dp), lambda b, qi: (b, qi, 0)),   # Q tile
                pl.BlockSpec((1, Kp, Dp), lambda b, qi: (b, 0, 0)),    # K (per batch)
                pl.BlockSpec((1, Kp, Vp), lambda b, qi: (b, 0, 0)),    # V (per batch)
                pl.BlockSpec((1, tq, 1),  lambda b, qi: (b, qi, 0)),   # valid lens
            ],
            out_specs=pl.BlockSpec((1, tq, Vp), lambda b, qi: (b, qi, 0)),
        ),
        compiler_params=pltpu.CompilerParams(
            dimension_semantics=("parallel", "parallel")),
        cost_estimate=cost,
    )(qp, kp, vp, vl)

    return out[:, :Q, :V]


def _ref_attention(q, k, v, valid_lens):
    """Pure-JAX reference mirroring the PyTorch module (dropout=identity)."""
    scores = jnp.einsum("bqd,bkd->bqk", q, k) / math.sqrt(q.shape[-1])
    if valid_lens is not None:
        if valid_lens.ndim == 1:
            vl2 = jnp.broadcast_to(valid_lens[:, None], scores.shape[:2])
        else:
            vl2 = valid_lens
        mask = jnp.arange(k.shape[1])[None, None, :] < vl2[:, :, None]
        scores = jnp.where(mask, scores, -1e6)
    w = jax.nn.softmax(scores, axis=-1)
    return jnp.einsum("bqk,bkv->bqv", w, v)


if __name__ == "__main__":
    key = jax.random.PRNGKey(0)
    kq, kk, kv = jax.random.split(key, 3)

    batch, num_q, num_kv, d, v_dim = 2, 4, 10, 8, 6
    queries = jax.random.normal(kq, (batch, num_q, d), jnp.float32)
    keys = jax.random.normal(kk, (batch, num_kv, d), jnp.float32)
    values = jax.random.normal(kv, (batch, num_kv, v_dim), jnp.float32)
    valid_lens = jnp.array([2, 6], dtype=jnp.int32)

    # With valid_lens
    y = dot_product_attention(queries, keys, values, valid_lens)
    y = jax.block_until_ready(y)
    ref = _ref_attention(queries, keys, values, valid_lens)
    assert y.shape == (batch, num_q, v_dim)
    assert jnp.allclose(y, ref, atol=1e-5, rtol=1e-5)

    # Without valid_lens (plain softmax path)
    y2 = jax.block_until_ready(dot_product_attention(queries, keys, values, None))
    ref2 = _ref_attention(queries, keys, values, None)
    assert jnp.allclose(y2, ref2, atol=1e-5, rtol=1e-5)

    print("KERNEL_OK")
</pallas_src>

<mosaic_0001>
module attributes {stable_mosaic.version = 11 : i64} {
  func.func @attn_kernel(%arg0: i32, %arg1: i32, %arg2: memref<1x8x128xf32, #tpu.memory_space<vmem>>, %arg3: memref<1x128x128xf32, #tpu.memory_space<vmem>>, %arg4: memref<1x128x128xf32, #tpu.memory_space<vmem>>, %arg5: memref<1x8x1xi32, #tpu.memory_space<vmem>>, %arg6: memref<1x8x128xf32, #tpu.memory_space<vmem>>) attributes {dimension_semantics = [#tpu.dimension_semantics<parallel>, #tpu.dimension_semantics<parallel>], iteration_bounds = array<i64: 2, 1>, scalar_prefetch = 0 : i64, scratch_operands = 0 : i64, tpu.core_type = #tpu.core_type<tc>, window_params = [{transform_indices = @transform_0, window_bounds = array<i64: 1, 8, 128>}, {transform_indices = @transform_1, window_bounds = array<i64: 1, 128, 128>}, {transform_indices = @transform_2, window_bounds = array<i64: 1, 128, 128>}, {transform_indices = @transform_3, window_bounds = array<i64: 1, 8, 1>}, {transform_indices = @transform_4, window_bounds = array<i64: 1, 8, 128>}]} {
    %c0 = arith.constant 0 : index
    %c0_0 = arith.constant 0 : index
    %c0_1 = arith.constant 0 : index
    %0 = vector.load %arg2[%c0, %c0_0, %c0_1] : memref<1x8x128xf32, #tpu.memory_space<vmem>>, vector<1x8x128xf32>
    %1 = vector.shape_cast %0 : vector<1x8x128xf32> to vector<8x128xf32>
    %c0_2 = arith.constant 0 : index
    %c0_3 = arith.constant 0 : index
    %c0_4 = arith.constant 0 : index
    %2 = vector.load %arg3[%c0_2, %c0_3, %c0_4] : memref<1x128x128xf32, #tpu.memory_space<vmem>>, vector<1x128x128xf32>
    %3 = vector.shape_cast %2 : vector<1x128x128xf32> to vector<128x128xf32>
    %c0_5 = arith.constant 0 : index
    %c0_6 = arith.constant 0 : index
    %c0_7 = arith.constant 0 : index
    %4 = vector.load %arg4[%c0_5, %c0_6, %c0_7] : memref<1x128x128xf32, #tpu.memory_space<vmem>>, vector<1x128x128xf32>
    %5 = vector.shape_cast %4 : vector<1x128x128xf32> to vector<128x128xf32>
    %c0_8 = arith.constant 0 : index
    %c0_9 = arith.constant 0 : index
    %c0_10 = arith.constant 0 : index
    %6 = vector.load %arg5[%c0_8, %c0_9, %c0_10] : memref<1x8x1xi32, #tpu.memory_space<vmem>>, vector<1x8x1xi32>
    %7 = vector.shape_cast %6 : vector<1x8x1xi32> to vector<8x1xi32>
    %cst = arith.constant dense<0.000000e+00> : vector<8x128xf32>
    %8 = tpu.matmul %1, %3, %cst {dimension_numbers = #tpu.dot_dimension_numbers<[1], [1], [0], [0], [0, 0, 1, 0], [], []>} : vector<8x128xf32>, vector<128x128xf32>, vector<8x128xf32> -> vector<8x128xf32>
    %cst_11 = arith.constant 0.353553385 : f32
    %9 = vector.broadcast %cst_11 : f32 to vector<8x128xf32>
    %10 = arith.mulf %8, %9 : vector<8x128xf32>
    %11 = tpu.iota {dimensions = array<i32: 1>} : vector<8x128xi32>
    %12 = vector.broadcast %7 : vector<8x1xi32> to vector<8x128xi32>
    %13 = arith.cmpi slt, %11, %12 : vector<8x128xi32>
    %cst_12 = arith.constant -1.000000e+06 : f32
    %14 = vector.broadcast %cst_12 : f32 to vector<8x128xf32>
    %15 = arith.select %13, %10, %14 : vector<8x128xi1>, vector<8x128xf32>
    %cst_13 = arith.constant dense<0xFF800000> : vector<8xf32>
    %16 = vector.multi_reduction <maximumf>, %15, %cst_13 [1] : vector<8x128xf32> to vector<8xf32>
    %17 = vector.shape_cast %16 : vector<8xf32> to vector<8x1xf32>
    %18 = vector.broadcast %17 : vector<8x1xf32> to vector<8x128xf32>
    %19 = arith.subf %15, %18 : vector<8x128xf32>
    %20 = math.exp %19 : vector<8x128xf32>
    %cst_14 = arith.constant dense<0.000000e+00> : vector<8xf32>
    %21 = vector.multi_reduction <add>, %20, %cst_14 [1] : vector<8x128xf32> to vector<8xf32>
    %22 = vector.shape_cast %21 : vector<8xf32> to vector<8x1xf32>
    %23 = tpu.reciprocal %22 : vector<8x1xf32> -> vector<8x1xf32>
    %24 = vector.broadcast %23 : vector<8x1xf32> to vector<8x128xf32>
    %25 = arith.mulf %20, %24 : vector<8x128xf32>
    %cst_15 = arith.constant dense<0.000000e+00> : vector<8x128xf32>
    %26 = tpu.matmul %25, %5, %cst_15 {dimension_numbers = #tpu.dot_dimension_numbers<[1], [0], [0], [1], [0, 0, 1, 1], [], []>} : vector<8x128xf32>, vector<128x128xf32>, vector<8x128xf32> -> vector<8x128xf32>
    %c0_16 = arith.constant 0 : index
    %c0_17 = arith.constant 0 : index
    %c0_18 = arith.constant 0 : index
    %27 = vector.load %arg6[%c0_16, %c0_17, %c0_18] : memref<1x8x128xf32, #tpu.memory_space<vmem>>, vector<1x8x128xf32>
    %28 = vector.shape_cast %27 : vector<1x8x128xf32> to vector<8x128xf32>
    %29 = vector.shape_cast %26 : vector<8x128xf32> to vector<1x8x128xf32>
    tpu.vector_store %arg6[%c0_16, %c0_17, %c0_18], %29 {strides = array<i32>} : memref<1x8x128xf32, #tpu.memory_space<vmem>>, vector<1x8x128xf32>,
    return
  }
  func.func @transform_0(%arg0: i32, %arg1: i32) -> (i32, i32, i32) {
    %c0_i32 = arith.constant 0 : i32
    %c0_i32_0 = arith.constant 0 : i32
    return %arg0, %arg1, %c0_i32 : i32, i32, i32
  }
  func.func @transform_1(%arg0: i32, %arg1: i32) -> (i32, i32, i32) {
    %c0_i32 = arith.constant 0 : i32
    %c0_i32_0 = arith.constant 0 : i32
    %c0_i32_1 = arith.constant 0 : i32
    return %arg0, %c0_i32, %c0_i32_0 : i32, i32, i32
  }
  func.func @transform_2(%arg0: i32, %arg1: i32) -> (i32, i32, i32) {
    %c0_i32 = arith.constant 0 : i32
    %c0_i32_0 = arith.constant 0 : i32
    %c0_i32_1 = arith.constant 0 : i32
    return %arg0, %c0_i32, %c0_i32_0 : i32, i32, i32
  }
  func.func @transform_3(%arg0: i32, %arg1: i32) -> (i32, i32, i32) {
    %c0_i32 = arith.constant 0 : i32
    %c0_i32_0 = arith.constant 0 : i32
    return %arg0, %arg1, %c0_i32 : i32, i32, i32
  }
  func.func @transform_4(%arg0: i32, %arg1: i32) -> (i32, i32, i32) {
    %c0_i32 = arith.constant 0 : i32
    %c0_i32_0 = arith.constant 0 : i32
    return %arg0, %arg1, %c0_i32 : i32, i32, i32
  }
}

</mosaic_0001>

<llo_original>
// kernel: tpu_custom_call.1
$region0: #{tpu_custom_call.1}
  #allocation0 [shape = 'u32[]', space=smem, size = 0x4, offset = 0x4, fixed_abs, tag = 'smem constant byte address 0x4 - core index']
  #allocation1 [shape = 'u32[72,128]{1,0:T(1,128)}', space=vmem, size = 0x9000, scoped, tag = 'internal scratch']
  %s0 = inlined_call_operand.vmem [shape: f32[2,8,128], index: 0, kind: input, shape index: {}]
  %s1 = inlined_call_operand.hbm [shape: f32[2,128,128], index: 1, kind: input, shape index: {}]
  %s2 = inlined_call_operand.hbm [shape: f32[2,128,128], index: 2, kind: input, shape index: {}]
  %s3 = inlined_call_operand.vmem [shape: s32[2,8,1], index: 3, kind: input, shape index: {}]
  %s4 = inlined_call_operand.hbm [shape: f32[2,8,128], index: 4, kind: output, shape index: {}]
  %s5 = sld [smem:[#allocation0]]
  $region57: #{tpu_custom_call.1} parent=0
    _
  %s7 = ssub.s32 1, %s5
  %s8 = scalar_select 0, %s7, %s5
  $region1: #{tpu_custom_call.1} parent=0
    #allocation2 [shape = 'u8[131072]{0}', space=vmem, size = 0x20000, scoped, tag = 'input window, operand 1']
    #allocation3 [shape = 's32[2]{0}', space=sflag, size = 0x8, scoped, tag = 'scoped memory for tpu_custom_call.1']
    #allocation4 [shape = 's32[2]{0}', space=sflag, size = 0x8, scoped, tag = 'scoped memory for tpu_custom_call.1']
    #allocation5 [shape = 'u8[131072]{0}', space=vmem, size = 0x20000, scoped, tag = 'input window, operand 2']
    #allocation6 [shape = 's32[2]{0}', space=sflag, size = 0x8, scoped, tag = 'scoped memory for tpu_custom_call.1']
    #allocation7 [shape = 'u8[8192]{0}', space=vmem, size = 0x2000, scoped, tag = 'output window, operand 0']
    %9 = vsyncpa [#allocation3], 0
    %s10 = scalar_lea.sflag [#allocation3], 1
    %11 = vsyncpa %s10, 0
    %12 = vsyncpa [#allocation6], 0
    %s13 = scalar_lea.sflag [#allocation6], 1
    %14 = vsyncpa %s13, 0
    %15 = vsyncpa [#allocation4], 0
    %s16 = scalar_lea.sflag [#allocation4], 1
    %17 = vsyncpa %s16, 0
    loop: start=0, step=1, limit=4
    $region2: #{tpu_custom_call.1} parent=1 // loop_pre_header
      _
    $region3: #{tpu_custom_call.1} parent=1 // loop_header
      %s19 = sphi 0, %s23
      %p20 = scmp.ge.s32.totalorder %s19, 4
      %s26 = sphi 0, %s38
      %s27 = sphi 0, %s34
      %s28 = sphi 0, %s26
      %s29 = sphi 0, %s27
      %s30 = sphi 0, %s28
      %s31 = sphi 0, %s29
      %s43 = sphi 0, %s45
      %s46 = sphi 0, %s43
      %s47 = sphi 0, %s46
      %s63 = sphi 0, %s47
      %s69 = sphi 0, %s71
      %s72 = sphi 0, %s69
      %s73 = sphi 0, %s72
      %s89 = sphi 0, %s73
      %s95 = sphi 0, %s97
      %s98 = sphi 0, %s95
      %s99 = sphi 0, %s98
      %s115 = sphi 0, %s99
      %s123 = sphi 0, %s125
      %s126 = sphi 0, %s123
      %s127 = sphi 0, %s126
      %s143 = sphi 0, %s127
      %s151 = sphi 0, %s153
      %s154 = sphi 0, %s151
      %s155 = sphi 0, %s154
      %s171 = sphi 0, %s155
    $region4: #{tpu_custom_call.1} parent=1 // loop_header_branch
      %22 = sbr.rel (%p20) target = $region8
    $region5: #{tpu_custom_call.1} parent=1 // loop_body
      %s24 = ssub.s32 %s19, 1
      %s25 = ssub.s32 %s19, 2
      %s32 = sadd.s32 1, %s27
      %p33 = scmp.ge.s32.totalorder %s32, 1
      %s34 = scalar_select %p33, 0, %s32
      %s35 = sadd.s32 1, %s26
      %s36 = scalar_select %p33, %s35, %s26
      %p37 = scmp.ge.s32.totalorder %s36, 2
      %s38 = scalar_select %p37, 0, %s36
      %s39 = ssub.s32 %s26, %s38
      %s40 = ssub.s32 %s27, %s34
      %s41 = sor.u32 %s39, %s40
      %p42 = scmp.eq.s32.totalorder %s41, 0
      %s44 = sadd.s32 %s43, 1
      %s45 = scalar_select %p42, %s43, %s44
      %p48 = pneg %p42
      %p49 = scmp.eq.s32.totalorder %s19, 1
      %p50 = por %p48, %p49
      %p51 = scmp.ne.s32.totalorder %s43, %s46
      %p52 = scmp.eq.s32.totalorder %s19, 0
      %p53 = por %p51, %p52
      %p54 = scmp.ne.s32.totalorder %s43, %s46
      %p55 = scmp.eq.s32.totalorder %s24, 1
      %p56 = por %p54, %p55
      %p57 = scmp.ne.s32.totalorder %s46, %s47
      %p58 = scmp.eq.s32.totalorder %s24, 0
      %p59 = por %p57, %p58
      %p60 = scmp.ne.s32.totalorder %s46, %s47
      %p61 = scmp.eq.s32.totalorder %s25, 1
      %p62 = por %p60, %p61
      %p64 = scmp.ne.s32.totalorder %s47, %s63
      %p65 = scmp.eq.s32.totalorder %s25, 0
      %p66 = por %p64, %p65
      %s67 = ssub.s32 %s26, %s38
      %p68 = scmp.eq.s32.totalorder %s67, 0
      %s70 = sadd.s32 %s69, 1
      %s71 = scalar_select %p68, %s69, %s70
      %p74 = pneg %p68
      %p75 = scmp.eq.s32.totalorder %s19, 1
      %p76 = por %p74, %p75
      %p77 = scmp.ne.s32.totalorder %s69, %s72
      %p78 = scmp.eq.s32.totalorder %s19, 0
      %p79 = por %p77, %p78
      %p80 = scmp.ne.s32.totalorder %s69, %s72
      %p81 = scmp.eq.s32.totalorder %s24, 1
      %p82 = por %p80, %p81
      %p83 = scmp.ne.s32.totalorder %s72, %s73
      %p84 = scmp.eq.s32.totalorder %s24, 0
      %p85 = por %p83, %p84
      %p86 = scmp.ne.s32.totalorder %s72, %s73
      %p87 = scmp.eq.s32.totalorder %s25, 1
      %p88 = por %p86, %p87
      %p90 = scmp.ne.s32.totalorder %s73, %s89
      %p91 = scmp.eq.s32.totalorder %s25, 0
      %p92 = por %p90, %p91
      %s93 = ssub.s32 %s26, %s38
      %p94 = scmp.eq.s32.totalorder %s93, 0
      %s96 = sadd.s32 %s95, 1
      %s97 = scalar_select %p94, %s95, %s96
      %p100 = pneg %p94
      %p101 = scmp.eq.s32.totalorder %s19, 1
      %p102 = por %p100, %p101
      %p103 = scmp.ne.s32.totalorder %s95, %s98
      %p104 = scmp.eq.s32.totalorder %s19, 0
      %p105 = por %p103, %p104
      %p106 = scmp.ne.s32.totalorder %s95, %s98
      %p107 = scmp.eq.s32.totalorder %s24, 1
      %p108 = por %p106, %p107
      %p109 = scmp.ne.s32.totalorder %s98, %s99
      %p110 = scmp.eq.s32.totalorder %s24, 0
      %p111 = por %p109, %p110
      %p112 = scmp.ne.s32.totalorder %s98, %s99
      %p113 = scmp.eq.s32.totalorder %s25, 1
      %p114 = por %p112, %p113
      %p116 = scmp.ne.s32.totalorder %s99, %s115
      %p117 = scmp.eq.s32.totalorder %s25, 0
      %p118 = por %p116, %p117
      %s119 = ssub.s32 %s26, %s38
      %s120 = ssub.s32 %s27, %s34
      %s121 = sor.u32 %s119, %s120
      %p122 = scmp.eq.s32.totalorder %s121, 0
      %s124 = sadd.s32 %s123, 1
      %s125 = scalar_select %p122, %s123, %s124
      %p128 = pneg %p122
      %p129 = scmp.eq.s32.totalorder %s19, 1
      %p130 = por %p128, %p129
      %p131 = scmp.ne.s32.totalorder %s123, %s126
      %p132 = scmp.eq.s32.totalorder %s19, 0
      %p133 = por %p131, %p132
      %p134 = scmp.ne.s32.totalorder %s123, %s126
      %p135 = scmp.eq.s32.totalorder %s24, 1
      %p136 = por %p134, %p135
      %p137 = scmp.ne.s32.totalorder %s126, %s127
      %p138 = scmp.eq.s32.totalorder %s24, 0
      %p139 = por %p137, %p138
      %p140 = scmp.ne.s32.totalorder %s126, %s127
      %p141 = scmp.eq.s32.totalorder %s25, 1
      %p142 = por %p140, %p141
      %p144 = scmp.ne.s32.totalorder %s127, %s143
      %p145 = scmp.eq.s32.totalorder %s25, 0
      %p146 = por %p144, %p145
      %s147 = ssub.s32 %s26, %s38
      %s148 = ssub.s32 %s27, %s34
      %s149 = sor.u32 %s147, %s148
      %p150 = scmp.eq.s32.totalorder %s149, 0
      %s152 = sadd.s32 %s151, 1
      %s153 = scalar_select %p150, %s151, %s152
      %p156 = pneg %p150
      %p157 = scmp.eq.s32.totalorder %s19, 1
      %p158 = por %p156, %p157
      %p159 = scmp.ne.s32.totalorder %s151, %s154
      %p160 = scmp.eq.s32.totalorder %s19, 0
      %p161 = por %p159, %p160
      %p162 = scmp.ne.s32.totalorder %s151, %s154
      %p163 = scmp.eq.s32.totalorder %s24, 1
      %p164 = por %p162, %p163
      %p165 = scmp.ne.s32.totalorder %s154, %s155
      %p166 = scmp.eq.s32.totalorder %s24, 0
      %p167 = por %p165, %p166
      %p168 = scmp.ne.s32.totalorder %s154, %s155
      %p169 = scmp.eq.s32.totalorder %s25, 1
      %p170 = por %p168, %p169
      %p172 = scmp.ne.s32.totalorder %s155, %s171
      %p173 = scmp.eq.s32.totalorder %s25, 0
      %p174 = por %p172, %p173
      %p175 = scmp.le.s32.totalorder 1, %s19
      %p176 = scmp.lt.s32.totalorder %s19, 3
      %p177 = pnand %p175, %p176
      %p178 = pneg %p177
      // Predicated region
      $region9: #{tpu_custom_call.1} parent=5 // pred_check
        _
      $region10: #{tpu_custom_call.1} parent=5 // pred_check_branch
        %180 = sbr.rel (%p177) target = $region12
      $region11: #{tpu_custom_call.1} parent=5 // pred_region
        %s181 = ssub.s32 %s19, 1
      $region12: #{tpu_custom_call.1} parent=5 // pred_fallthru
        _
      %p182 = scmp.lt.s32.totalorder %s19, 2
      // Predicated region
      $region13: #{tpu_custom_call.1} parent=5 // pred_check
        %p183 = pneg %p182
      $region14: #{tpu_custom_call.1} parent=5 // pred_check_branch
        %185 = sbr.rel (%p183) target = $region16
      $region15: #{tpu_custom_call.1} parent=5 // pred_region
        // Predicated region
        $region17: #{tpu_custom_call.1} parent=15 // pred_check
          %p186 = pneg %p53
        $region18: #{tpu_custom_call.1} parent=15 // pred_check_branch
          %188 = sbr.rel (%p186) target = $region20
        $region19: #{tpu_custom_call.1} parent=15 // pred_region
          %p189 = scmp.lt.s32.totalorder %s26, 1
          %s190 = scalar_select %p189, %s26, 1
          %p191 = scmp.lt.s32.totalorder %s27, 0
          %s192 = scalar_select %p191, %s27, 0
          %s193 = sadd.s32 %s192, %s190
          %s194 = smul.addr %s193, 8
          %s195 = scalar_lea.vmem %s0, %s194
        $region20: #{tpu_custom_call.1} parent=15 // pred_fallthru
          _
        // Predicated region
        $region21: #{tpu_custom_call.1} parent=15 // pred_check
          %p196 = pneg %p79
        $region22: #{tpu_custom_call.1} parent=15 // pred_check_branch
          %198 = sbr.rel (%p196) target = $region24
        $region23: #{tpu_custom_call.1} parent=15 // pred_region
          %s199 = sand.u32 %s69, 1
          %s200 = scalar_lea.sflag [#allocation3], %s199
          %s201 = sand.u32 %s69, 1
          %s202 = smul.addr %s201, 128
          %s203 = scalar_lea.vmem [#allocation2], %s202
          %205 = vsyncadd %s200, 0
          %s206 = smul.addr %s26, 16
          %s207 = smul.addr %s206, 8
          %s208 = scalar_lea.hbm %s1, %s207
          %s209 = sshll.u32 %s208, 4
          %s210 = int_to_ptr.hbm [resolvable:$true] %s209
          %s211 = sshll.u32 %s203, 4
          %s212 = int_to_ptr.vmem [resolvable:$true] %s211
          %217 = dma.hbm_to_vmem [thread:$0]  %s210, 2048, %s212, %s200, 128, 128, 8
        $region24: #{tpu_custom_call.1} parent=15 // pred_fallthru
          _
        // Predicated region
        $region25: #{tpu_custom_call.1} parent=15 // pred_check
          %p218 = pneg %p105
        $region26: #{tpu_custom_call.1} parent=15 // pred_check_branch
          %220 = sbr.rel (%p218) target = $region28
        $region27: #{tpu_custom_call.1} parent=15 // pred_region
          %s221 = sand.u32 %s95, 1
          %s222 = scalar_lea.sflag [#allocation6], %s221
          %s223 = sand.u32 %s95, 1
          %s224 = smul.addr %s223, 128
          %s225 = scalar_lea.vmem [#allocation5], %s224
          %227 = vsyncadd %s222, 0
          %s228 = smul.addr %s26, 16
          %s229 = smul.addr %s228, 8
          %s230 = scalar_lea.hbm %s2, %s229
          %s231 = sshll.u32 %s230, 4
          %s232 = int_to_ptr.hbm [resolvable:$true] %s231
          %s233 = sshll.u32 %s225, 4
          %s234 = int_to_ptr.vmem [resolvable:$true] %s233
          %239 = dma.hbm_to_vmem [thread:$0]  %s232, 2048, %s234, %s222, 128, 128, 8
        $region28: #{tpu_custom_call.1} parent=15 // pred_fallthru
          _
        // Predicated region
        $region29: #{tpu_custom_call.1} parent=15 // pred_check
          %p240 = pneg %p133
        $region30: #{tpu_custom_call.1} parent=15 // pred_check_branch
          %242 = sbr.rel (%p240) target = $region32
        $region31: #{tpu_custom_call.1} parent=15 // pred_region
          %p243 = scmp.lt.s32.totalorder %s26, 1
          %s244 = scalar_select %p243, %s26, 1
          %p245 = scmp.lt.s32.totalorder %s27, 0
          %s246 = scalar_select %p245, %s27, 0
          %s247 = sadd.s32 %s246, %s244
          %s248 = smul.addr %s247, 8
          %s249 = scalar_lea.vmem %s3, %s248
        $region32: #{tpu_custom_call.1} parent=15 // pred_fallthru
          _
      $region16: #{tpu_custom_call.1} parent=5 // pred_fallthru
        _
      %p250 = scmp.le.s32.totalorder 1, %s19
      %p251 = scmp.lt.s32.totalorder %s19, 3
      %p252 = pnand %p250, %p251
      %p253 = pneg %p252
      // Predicated region
      $region33: #{tpu_custom_call.1} parent=5 // pred_check
        _
      $region34: #{tpu_custom_call.1} parent=5 // pred_check_branch
        %255 = sbr.rel (%p252) target = $region36
      $region35: #{tpu_custom_call.1} parent=5 // pred_region
        %s256 = ssub.s32 %s19, 1
        %s257 = sand.u32 %s72, 1
        %s258 = scalar_lea.sflag [#allocation3], %s257
        %s259 = sand.u32 %s72, 1
        %s260 = smul.addr %s259, 128
        %s261 = scalar_lea.vmem [#allocation2], %s260
        // Predicated region
        $region37: #{tpu_custom_call.1} parent=35 // pred_check
          %p262 = pneg %p85
        $region38: #{tpu_custom_call.1} parent=35 // pred_check_branch
          %264 = sbr.rel (%p262) target = $region40
        $region39: #{tpu_custom_call.1} parent=35 // pred_region
          %266 = dma.done %s258, 2048
        $region40: #{tpu_custom_call.1} parent=35 // pred_fallthru
          _
        %s267 = sand.u32 %s98, 1
        %s268 = scalar_lea.sflag [#allocation6], %s267
        %s269 = sand.u32 %s98, 1
        %s270 = smul.addr %s269, 128
        %s271 = scalar_lea.vmem [#allocation5], %s270
        // Predicated region
        $region41: #{tpu_custom_call.1} parent=35 // pred_check
          %p272 = pneg %p111
        $region42: #{tpu_custom_call.1} parent=35 // pred_check_branch
          %274 = sbr.rel (%p272) target = $region44
        $region43: #{tpu_custom_call.1} parent=35 // pred_region
          %276 = dma.done %s268, 2048
        $region44: #{tpu_custom_call.1} parent=35 // pred_fallthru
          _
        %p277 = scmp.lt.s32.totalorder %s28, 1
        %s278 = scalar_select %p277, %s28, 1
        %p279 = scmp.lt.s32.totalorder %s29, 0
        %s280 = scalar_select %p279, %s29, 0
        %s281 = sadd.s32 %s280, %s278
        %s282 = smul.addr %s281, 8
        %s283 = scalar_lea.vmem %s0, %s282
        %p284 = pneg %p59
        %p285 = pneg %p56
        %s286 = sand.u32 %s72, 1
        %s287 = scalar_lea.sflag [#allocation3], %s286
        %s288 = sand.u32 %s72, 1
        %s289 = smul.addr %s288, 128
        %s290 = scalar_lea.vmem [#allocation2], %s289
        %p291 = pneg %p85
        %p292 = pneg %p82
        %s293 = sand.u32 %s98, 1
        %s294 = scalar_lea.sflag [#allocation6], %s293
        %s295 = sand.u32 %s98, 1
        %s296 = smul.addr %s295, 128
        %s297 = scalar_lea.vmem [#allocation5], %s296
        %p298 = pneg %p111
        %p299 = pneg %p108
        %p300 = scmp.lt.s32.totalorder %s28, 1
        %s301 = scalar_select %p300, %s28, 1
        %p302 = scmp.lt.s32.totalorder %s29, 0
        %s303 = scalar_select %p302, %s29, 0
        %s304 = sadd.s32 %s303, %s301
        %s305 = smul.addr %s304, 8
        %s306 = scalar_lea.vmem %s3, %s305
        %p307 = pneg %p139
        %p308 = pneg %p136
        %p309 = pneg %p167
        %p310 = pneg %p164
        %s311 = sand.u32 %s154, 1
        %s312 = scalar_lea.sflag [#allocation4], %s311
        %s313 = sand.u32 %s154, 1
        %s314 = smul.addr %s313, 8
        %s315 = scalar_lea.vmem [#allocation7], %s314
        %p316 = scmp.lt.s32.totalorder %s28, 1
        %s317 = scalar_select %p316, %s28, 1
        %p318 = scmp.lt.s32.totalorder %s29, 0
        %s319 = scalar_select %p318, %s29, 0
        %s320 = sadd.s32 %s319, %s317
        %s321 = smul.addr %s320, 8
        %s322 = scalar_lea.vmem %s0, %s321
        %p323 = scmp.lt.s32.totalorder %s28, 1
        %s324 = scalar_select %p323, %s28, 1
        %p325 = scmp.lt.s32.totalorder %s29, 0
        %s326 = scalar_select %p325, %s29, 0
        %s327 = sadd.s32 %s326, %s324
        %s328 = smul.addr %s327, 8
        %s329 = scalar_lea.vmem %s3, %s328
        %v330 = vld [vmem:[%s322] sm:$0xff]
        %v331 = vld [vmem:[%s261] sm:$0xff]
        %v332 = vld [vmem:[%s261 + $0x8] sm:$0xff]
        %v333 = vld [vmem:[%s261 + $0x10] sm:$0xff]
        %v334 = vld [vmem:[%s261 + $0x18] sm:$0xff]
        %v335 = vld [vmem:[%s261 + $0x20] sm:$0xff]
        %v336 = vld [vmem:[%s261 + $0x28] sm:$0xff]
        %v337 = vld [vmem:[%s261 + $0x30] sm:$0xff]
        %v338 = vld [vmem:[%s261 + $0x38] sm:$0xff]
        %v339 = vld [vmem:[%s261 + $0x40] sm:$0xff]
        %v340 = vld [vmem:[%s261 + $0x48] sm:$0xff]
        %v341 = vld [vmem:[%s261 + $0x50] sm:$0xff]
        %v342 = vld [vmem:[%s261 + $0x58] sm:$0xff]
        %v343 = vld [vmem:[%s261 + $0x60] sm:$0xff]
        %v344 = vld [vmem:[%s261 + $0x68] sm:$0xff]
        %v345 = vld [vmem:[%s261 + $0x70] sm:$0xff]
        %v346 = vld [vmem:[%s261 + $0x78] sm:$0xff]
        %v347 = vld [vmem:[%s271] sm:$0xff]
        %v348 = vld [vmem:[%s271 + $0x8] sm:$0xff]
        %v349 = vld [vmem:[%s271 + $0x10] sm:$0xff]
        %v350 = vld [vmem:[%s271 + $0x18] sm:$0xff]
        %v351 = vld [vmem:[%s271 + $0x20] sm:$0xff]
        %v352 = vld [vmem:[%s271 + $0x28] sm:$0xff]
        %v353 = vld [vmem:[%s271 + $0x30] sm:$0xff]
        %v354 = vld [vmem:[%s271 + $0x38] sm:$0xff]
        %v355 = vld [vmem:[%s271 + $0x40] sm:$0xff]
        %v356 = vld [vmem:[%s271 + $0x48] sm:$0xff]
        %v357 = vld [vmem:[%s271 + $0x50] sm:$0xff]
        %v358 = vld [vmem:[%s271 + $0x58] sm:$0xff]
        %v359 = vld [vmem:[%s271 + $0x60] sm:$0xff]
        %v360 = vld [vmem:[%s271 + $0x68] sm:$0xff]
        %v361 = vld [vmem:[%s271 + $0x70] sm:$0xff]
        %v362 = vld [vmem:[%s271 + $0x78] sm:$0xff]
        %v363 = vld [vmem:[%s329] sm:$0xff]
        %364 = vmatpush.xpose.msra.mxu0 %v346
        %365 = vmatpush.xpose.msra.mxu0 %v345
        %366 = vmatpush.xpose.msra.mxu0 %v344
        %367 = vmatpush.xpose.msra.mxu0 %v343
        %368 = vmatpush.xpose.msra.mxu0 %v342
        %369 = vmatpush.xpose.msra.mxu0 %v341
        %370 = vmatpush.xpose.msra.mxu0 %v340
        %371 = vmatpush.xpose.msra.mxu0 %v339
        %372 = vmatpush.xpose.msra.mxu0 %v338
        %373 = vmatpush.xpose.msra.mxu0 %v337
        %374 = vmatpush.xpose.msra.mxu0 %v336
        %375 = vmatpush.xpose.msra.mxu0 %v335
        %376 = vmatpush.xpose.msra.mxu0 %v334
        %377 = vmatpush.xpose.msra.mxu0 %v333
        %378 = vmatpush.xpose.msra.mxu0 %v332
        %379 = vmatpush.xpose.msra.mxu0 %v331
        %380 = vmatmul.f32.gmra.mxu0 %v330
        %v381 = vpop.f32.mrf.mxu0
        %v382 = vadd.f32 0.0, %v381
        %383 = vdwg.mxu0
        %v384 = vmul.f32 %v382, 0.35355338
        %v385 = vlaneseq
        %v386 = vand.u32 %v385, 127
        %387 = vset.pattern.permute.xlu0 0
        %388 = vperm.xlu0 %387, %v363
        %v389 = vpop.permute.xlu0 %388
        %vm390 = vcmp.lt.s32.totalorder %v386, %v389
        %v391 = vsel %vm390, %v384, -1000000.0
        %392 = vmax.xlane.f32.xlu0 %v391
        %v393 = vpop.xlane.xlu0 %392
        %v394 = vsub.f32 %v391, %v393
        %v395 = vmul.f32 %v394, 1.442695
        %v396 = vpow.pop %v395
        %397 = vadd.xlane.f32.xlu0 %v396
        %v398 = vpop.xlane.xlu0 %397
        %v399 = vrcp.pop %v398
        %v400 = vmul.f32 %v398, %v399
        %v401 = vsub.f32 1.0, %v400
        %v402 = vmul.f32 %v399, %v401
        %v403 = vadd.f32 %v399, %v402
        %vm404 = vweird.f32 %v398
        %vm405 = vweird.f32 %v399
        %vm406 = vmor %vm404, %vm405
        %v407 = vsel %vm406, %v399, %v403
        %v408 = vand.u32 2147483647, %v398
        %vm409 = vcmp.eq.f32.partialorder %v408, 8.507059e+37
        %v410 = vand.u32 %v398, 2147483648
        %v411 = vor.u32 1.1754944e-38, %v410
        %v412 = vsel %vm409, %v411, %v407
        %v413 = vmul.f32 %v396, %v412
        %414 = vmatpush.msra.mxu0 %v362
        %415 = vmatpush.msra.mxu0 %v361
        %416 = vmatpush.msra.mxu0 %v360
        %417 = vmatpush.msra.mxu0 %v359
        %418 = vmatpush.msra.mxu0 %v358
        %419 = vmatpush.msra.mxu0 %v357
        %420 = vmatpush.msra.mxu0 %v356
        %421 = vmatpush.msra.mxu0 %v355
        %422 = vmatpush.msra.mxu0 %v354
        %423 = vmatpush.msra.mxu0 %v353
        %424 = vmatpush.msra.mxu0 %v352
        %425 = vmatpush.msra.mxu0 %v351
        %426 = vmatpush.msra.mxu0 %v350
        %427 = vmatpush.msra.mxu0 %v349
        %428 = vmatpush.msra.mxu0 %v348
        %429 = vmatpush.msra.mxu0 %v347
        %430 = vmatmul.f32.gmra.mxu0 %v413
        %v431 = vpop.f32.mrf.mxu0
        %v432 = vadd.f32 0.0, %v431
        %433 = vdwg.mxu0
        %434 = vst [vmem:[%s315] sm:$0xff] %v432
        %s435 = sand.u32 %s154, 1
        %s436 = scalar_lea.sflag [#allocation4], %s435
        %s437 = sand.u32 %s154, 1
        %s438 = smul.addr %s437, 8
        %s439 = scalar_lea.vmem [#allocation7], %s438
        // Predicated region
        $region45: #{tpu_custom_call.1} parent=35 // pred_check
          %p440 = pneg %p164
        $region46: #{tpu_custom_call.1} parent=35 // pred_check_branch
          %442 = sbr.rel (%p440) target = $region48
        $region47: #{tpu_custom_call.1} parent=35 // pred_region
          %444 = vsyncadd %s436, 0
          %s445 = sadd.s32 %s29, %s28
          %s446 = smul.addr %s445, 8
          %s447 = scalar_lea.hbm %s4, %s446
          %s449 = sshll.u32 %s439, 4
          %s450 = int_to_ptr.vmem [resolvable:$true] %s449
          %s451 = sshll.u32 %s447, 4
          %s452 = int_to_ptr.hbm [resolvable:$true] %s451
          %454 = dma.vmem_to_hbm [thread:$0]  %s450, 128, %s452, %s436
        $region48: #{tpu_custom_call.1} parent=35 // pred_fallthru
          _
      $region36: #{tpu_custom_call.1} parent=5 // pred_fallthru
        _
      %p455 = scmp.le.s32.totalorder 2, %s19
      // Predicated region
      $region49: #{tpu_custom_call.1} parent=5 // pred_check
        %p456 = pneg %p455
      $region50: #{tpu_custom_call.1} parent=5 // pred_check_branch
        %458 = sbr.rel (%p456) target = $region52
      $region51: #{tpu_custom_call.1} parent=5 // pred_region
        %s459 = ssub.s32 %s19, 2
        // Predicated region
        $region53: #{tpu_custom_call.1} parent=51 // pred_check
          %p460 = pneg %p170
        $region54: #{tpu_custom_call.1} parent=51 // pred_check_branch
          %462 = sbr.rel (%p460) target = $region56
        $region55: #{tpu_custom_call.1} parent=51 // pred_region
          %s463 = sand.u32 %s155, 1
          %s464 = scalar_lea.sflag [#allocation4], %s463
          %s465 = sand.u32 %s155, 1
          %s466 = smul.addr %s465, 8
          %s467 = scalar_lea.vmem [#allocation7], %s466
          %469 = dma.done %s464, 128
        $region56: #{tpu_custom_call.1} parent=51 // pred_fallthru
          _
      $region52: #{tpu_custom_call.1} parent=5 // pred_fallthru
        _
    $region6: #{tpu_custom_call.1} parent=1 // loop_footer
      %s23 = sadd.s32 1, %s19
    $region7: #{tpu_custom_call.1} parent=1 // loop_footer_branch
      %18 = sbr.rel target = $region3
    $region8: #{tpu_custom_call.1} parent=1 // loop_exit
      _
    %470 = vsyncpa [#allocation3], 1
    %s471 = scalar_lea.sflag [#allocation3], 1
    %472 = vsyncpa %s471, 1
    %473 = vsyncpa [#allocation6], 1
    %s474 = scalar_lea.sflag [#allocation6], 1
    %475 = vsyncpa %s474, 1
    %476 = vsyncpa [#allocation4], 1
    %s477 = scalar_lea.sflag [#allocation4], 1
    %478 = vsyncpa %s477, 1

</llo_original>
